<compile_context>
chip_gen: v7x
topology: tpu7x:2x2x1
jax: 0.10.0
libtpu: 0.0.40
codegen_flags: <defaults>
</compile_context>

<pallas_src>
import functools

import jax
import jax.numpy as jnp
from jax.experimental import pallas as pl
from jax.experimental.pallas import tpu as pltpu

_NEG_PAD = -1e30  # finite "minus infinity" bias for padded vocab columns (f32)
_VMEM_LIMIT = 64 * 1024 * 1024  # fits v7x's 64 MiB physical VMEM; > v5e's 16 MiB default


def _logits_lse_kernel(x_ref, w_ref, b_ref, logits_ref, lse_ref, m_ref, l_ref):
    # grid = (row_tiles, vocab_tiles); j (vocab) is the inner, sequential axis.
    j = pl.program_id(1)

    @pl.when(j == 0)
    def _init():
        m_ref[...] = jnp.full(m_ref.shape, -jnp.inf, dtype=m_ref.dtype)
        l_ref[...] = jnp.zeros(l_ref.shape, dtype=l_ref.dtype)

    # bf16 x bf16 -> f32 accumulation on the MXU; bias add + softmax math in f32.
    logits = jnp.dot(x_ref[...], w_ref[...],
                     preferred_element_type=jnp.float32) + b_ref[...]

    # Online logsumexp over the vocab tiles.
    m_old = m_ref[...]
    m_new = jnp.maximum(m_old, jnp.max(logits, axis=-1, keepdims=True))
    l_ref[...] = (jnp.exp(m_old - m_new) * l_ref[...]
                  + jnp.sum(jnp.exp(logits - m_new), axis=-1, keepdims=True))
    m_ref[...] = m_new

    # Store the unnormalized logits (single matmul sweep; normalization is a
    # separate, matmul-free fix-up kernel).
    logits_ref[...] = logits.astype(logits_ref.dtype)

    @pl.when(j == pl.num_programs(1) - 1)
    def _finalize():
        # lse computed exactly once per row tile.
        lse_ref[...] = m_ref[...] + jnp.log(l_ref[...])


def _normalize_kernel(logits_ref, lse_ref, o_ref):
    # In-place (aliased) normalization: out = logits - lse.
    o_ref[...] = (logits_ref[...].astype(jnp.float32)
                  - lse_ref[...]).astype(o_ref.dtype)


def generator_forward(x, w, b, *, tm=512, tn=512,
                      out_dtype=jnp.bfloat16, matmul_dtype=jnp.bfloat16):
    """x: [B, S, d_model]; w: [d_model, vocab] (PyTorch weight.T); b: [vocab].

    Returns log_softmax(x @ w + b, axis=-1) with shape [B, S, vocab].
    """
    B, S, d_model = x.shape
    V = w.shape[1]
    N = B * S

    # Clamp tiles for small problems; keep sublane (8) / lane (128) alignment.
    tm = min(tm, ((N + 7) // 8) * 8)
    tn = min(tn, ((V + 127) // 128) * 128)

    Np = pl.cdiv(N, tm) * tm          # padded row count
    Vp = pl.cdiv(V, tn) * tn          # padded vocab (pick tn | vocab to make Vp == V)
    nvt = Vp // tn

    x2d = x.reshape(N, d_model).astype(matmul_dtype)
    if Np != N:
        x2d = jnp.pad(x2d, ((0, Np - N), (0, 0)))

    wp = w.astype(matmul_dtype)
    bp = b.astype(jnp.float32)
    if Vp != V:
        wp = jnp.pad(wp, ((0, 0), (0, Vp - V)))
        bp = jnp.pad(bp, (0, Vp - V), constant_values=_NEG_PAD)
    # Pre-tile W once into tile-major [nvt, d_model, tn]: each vocab tile is a
    # single contiguous HBM slab (amortized; W is static).
    wt = wp.reshape(d_model, nvt, tn).transpose(1, 0, 2)
    bp = bp.reshape(1, Vp)

    # ---- Kernel 1: logits + per-row logsumexp (one matmul sweep) ----
    logits, lse = pl.pallas_call(
        _logits_lse_kernel,
        out_shape=(jax.ShapeDtypeStruct((Np, Vp), out_dtype),
                   jax.ShapeDtypeStruct((Np, 1), jnp.float32)),
        grid=(Np // tm, nvt),
        in_specs=[
            # activation row tile: resident across the vocab sweep
            pl.BlockSpec((tm, d_model), lambda i, j: (i, 0)),
            # contiguous, pre-tiled weight tile (leading dim squeezed away)
            pl.BlockSpec((None, d_model, tn), lambda i, j: (j, 0, 0)),
            # f32 bias tile (tiny DMA; keeps the NEG_PAD bias path in f32)
            pl.BlockSpec((1, tn), lambda i, j: (0, j)),
        ],
        out_specs=(
            pl.BlockSpec((tm, tn), lambda i, j: (i, j)),   # unnormalized logits
            pl.BlockSpec((tm, 1), lambda i, j: (i, 0)),    # per-row lse
        ),
        scratch_shapes=[
            pltpu.VMEM((tm, 1), jnp.float32),   # running max
            pltpu.VMEM((tm, 1), jnp.float32),   # running sum-exp
        ],
        compiler_params=pltpu.CompilerParams(
            dimension_semantics=("parallel", "arbitrary"),
            vmem_limit_bytes=_VMEM_LIMIT),
    )(x2d, wt, bp)

    # ---- Kernel 2: matmul-free normalization, in place on the logits ----
    out = pl.pallas_call(
        _normalize_kernel,
        out_shape=jax.ShapeDtypeStruct((Np, Vp), out_dtype),
        grid=(Np // tm, nvt),
        in_specs=[
            pl.BlockSpec((tm, tn), lambda i, j: (i, j)),
            pl.BlockSpec((tm, 1), lambda i, j: (i, 0)),
        ],
        out_specs=pl.BlockSpec((tm, tn), lambda i, j: (i, j)),
        input_output_aliases={0: 0},   # normalize the logits buffer in place
        compiler_params=pltpu.CompilerParams(
            dimension_semantics=("parallel", "parallel"),
            vmem_limit_bytes=_VMEM_LIMIT),
    )(logits, lse)

    out = out[:N]
    if Vp != V:
        out = out[:, :V]
    return out.reshape(B, S, V)


if __name__ == "__main__":
    # Small shapes consistent with the module; vocab deliberately NOT a
    # multiple of the vocab tile so padding + online logsumexp are exercised.
    B, S, d_model, vocab = 2, 8, 32, 1000

    key = jax.random.PRNGKey(0)
    kx, kw, kb = jax.random.split(key, 3)

    x = jax.random.normal(kx, (B, S, d_model), dtype=jnp.float32)
    # Deterministic "Linear" params (PyTorch weight is [vocab, d_model]; we
    # store its transpose).
    bound = 1.0 / (d_model ** 0.5)
    w = jax.random.uniform(kw, (d_model, vocab), jnp.float32, -bound, bound)
    b = jax.random.uniform(kb, (vocab,), jnp.float32, -bound, bound)

    # f32 output for the strict correctness check (bf16 is the recommended
    # inference default and halves the output HBM stream).
    fwd = jax.jit(functools.partial(generator_forward, out_dtype=jnp.float32))
    out = jax.block_until_ready(fwd(x, w, b))

    # Reference in plain JAX (f32 end to end).
    ref = jax.nn.log_softmax(x @ w + b, axis=-1)

    assert out.shape == (B, S, vocab)
    # bf16 matmul inputs -> loosened absolute tolerance on the log-probs.
    assert jnp.allclose(out, ref, atol=5e-2, rtol=0), "mismatch vs reference"
    # log-probs must exponentiate to a proper distribution per row.
    prob_sums = jnp.sum(jnp.exp(out), axis=-1)
    assert jnp.allclose(prob_sums, 1.0, atol=1e-3), "rows do not normalize"

    print("KERNEL_OK")
</pallas_src>

<mosaic_0001>
module attributes {stable_mosaic.version = 11 : i64} {
  func.func @_normalize_kernel(%arg0: i32, %arg1: i32, %arg2: memref<16x512xf32, #tpu.memory_space<vmem>>, %arg3: memref<16x1xf32, #tpu.memory_space<vmem>>, %arg4: memref<16x512xf32, #tpu.memory_space<vmem>>) attributes {dimension_semantics = [#tpu.dimension_semantics<parallel>, #tpu.dimension_semantics<parallel>], iteration_bounds = array<i64: 1, 2>, scalar_prefetch = 0 : i64, scratch_operands = 0 : i64, tpu.core_type = #tpu.core_type<tc>, window_params = [{transform_indices = @transform_0, window_bounds = array<i64: 16, 512>}, {transform_indices = @transform_1, window_bounds = array<i64: 16, 1>}, {transform_indices = @transform_2, window_bounds = array<i64: 16, 512>}]} {
    %c0 = arith.constant 0 : index
    %c0_0 = arith.constant 0 : index
    %0 = vector.load %arg2[%c0, %c0_0] : memref<16x512xf32, #tpu.memory_space<vmem>>, vector<16x512xf32>
    %c0_1 = arith.constant 0 : index
    %c0_2 = arith.constant 0 : index
    %1 = vector.load %arg3[%c0_1, %c0_2] : memref<16x1xf32, #tpu.memory_space<vmem>>, vector<16x1xf32>
    %2 = vector.broadcast %1 : vector<16x1xf32> to vector<16x512xf32>
    %3 = arith.subf %0, %2 : vector<16x512xf32>
    %c0_3 = arith.constant 0 : index
    %c0_4 = arith.constant 0 : index
    %4 = vector.load %arg4[%c0_3, %c0_4] : memref<16x512xf32, #tpu.memory_space<vmem>>, vector<16x512xf32>
    tpu.vector_store %arg4[%c0_3, %c0_4], %3 {strides = array<i32>} : memref<16x512xf32, #tpu.memory_space<vmem>>, vector<16x512xf32>,
    return
  }
  func.func @transform_0(%arg0: i32, %arg1: i32) -> (i32, i32) {
    %c0_i32 = arith.constant 0 : i32
    return %arg0, %arg1 : i32, i32
  }
  func.func @transform_1(%arg0: i32, %arg1: i32) -> (i32, i32) {
    %c0_i32 = arith.constant 0 : i32
    %c0_i32_0 = arith.constant 0 : i32
    return %arg0, %c0_i32 : i32, i32
  }
  func.func @transform_2(%arg0: i32, %arg1: i32) -> (i32, i32) {
    %c0_i32 = arith.constant 0 : i32
    return %arg0, %arg1 : i32, i32
  }
}

module attributes {stable_mosaic.version = 11 : i64} {
  func.func @_logits_lse_kernel(%arg0: i32, %arg1: i32, %arg2: memref<16x32xbf16, #tpu.memory_space<vmem>>, %arg3: memref<1x32x512xbf16, #tpu.memory_space<vmem>>, %arg4: memref<1x512xf32, #tpu.memory_space<vmem>>, %arg5: memref<16x512xf32, #tpu.memory_space<vmem>>, %arg6: memref<16x1xf32, #tpu.memory_space<vmem>>, %arg7: memref<16x1xf32, #tpu.memory_space<vmem>>, %arg8: memref<16x1xf32, #tpu.memory_space<vmem>>) attributes {dimension_semantics = [#tpu.dimension_semantics<parallel>, #tpu.dimension_semantics<arbitrary>], iteration_bounds = array<i64: 1, 2>, scalar_prefetch = 0 : i64, scratch_operands = 2 : i64, tpu.core_type = #tpu.core_type<tc>, window_params = [{transform_indices = @transform_0, window_bounds = array<i64: 16, 32>}, {transform_indices = @transform_1, window_bounds = array<i64: 1, 32, 512>}, {transform_indices = @transform_2, window_bounds = array<i64: 1, 512>}, {transform_indices = @transform_3, window_bounds = array<i64: 16, 512>}, {transform_indices = @transform_4, window_bounds = array<i64: 16, 1>}]} {
    %c0_i32 = arith.constant 0 : i32
    %0 = arith.cmpi eq, %arg1, %c0_i32 : i32
    %1 = arith.extui %0 : i1 to i32
    %c0_i32_0 = arith.constant 0 : i32
    %2 = arith.cmpi ne, %1, %c0_i32_0 : i32
    scf.if %2 {
      %cst_20 = arith.constant 0xFF800000 : f32
      %30 = vector.broadcast %cst_20 : f32 to vector<16x1xf32>
      %c0_21 = arith.constant 0 : index
      %c0_22 = arith.constant 0 : index
      %31 = vector.load %arg7[%c0_21, %c0_22] : memref<16x1xf32, #tpu.memory_space<vmem>>, vector<16x1xf32>
      tpu.vector_store %arg7[%c0_21, %c0_22], %30 {strides = array<i32>} : memref<16x1xf32, #tpu.memory_space<vmem>>, vector<16x1xf32>,
      %cst_23 = arith.constant 0.000000e+00 : f32
      %32 = vector.broadcast %cst_23 : f32 to vector<16x1xf32>
      %c0_24 = arith.constant 0 : index
      %c0_25 = arith.constant 0 : index
      %33 = vector.load %arg8[%c0_24, %c0_25] : memref<16x1xf32, #tpu.memory_space<vmem>>, vector<16x1xf32>
      tpu.vector_store %arg8[%c0_24, %c0_25], %32 {strides = array<i32>} : memref<16x1xf32, #tpu.memory_space<vmem>>, vector<16x1xf32>,
    } else {
    }
    %c0 = arith.constant 0 : index
    %c0_1 = arith.constant 0 : index
    %3 = vector.load %arg2[%c0, %c0_1] : memref<16x32xbf16, #tpu.memory_space<vmem>>, vector<16x32xbf16>
    %c0_2 = arith.constant 0 : index
    %c0_3 = arith.constant 0 : index
    %c0_4 = arith.constant 0 : index
    %4 = vector.load %arg3[%c0_2, %c0_3, %c0_4] : memref<1x32x512xbf16, #tpu.memory_space<vmem>>, vector<1x32x512xbf16>
    %5 = vector.shape_cast %4 : vector<1x32x512xbf16> to vector<32x512xbf16>
    %cst = arith.constant dense<0.000000e+00> : vector<16x512xf32>
    %6 = tpu.matmul %3, %5, %cst {dimension_numbers = #tpu.dot_dimension_numbers<[1], [0], [0], [1], [0, 0, 1, 1], [], []>} : vector<16x32xbf16>, vector<32x512xbf16>, vector<16x512xf32> -> vector<16x512xf32>
    %c0_5 = arith.constant 0 : index
    %c0_6 = arith.constant 0 : index
    %7 = vector.load %arg4[%c0_5, %c0_6] : memref<1x512xf32, #tpu.memory_space<vmem>>, vector<1x512xf32>
    %8 = vector.broadcast %7 : vector<1x512xf32> to vector<16x512xf32>
    %9 = arith.addf %6, %8 : vector<16x512xf32>
    %c0_7 = arith.constant 0 : index
    %c0_8 = arith.constant 0 : index
    %10 = vector.load %arg7[%c0_7, %c0_8] : memref<16x1xf32, #tpu.memory_space<vmem>>, vector<16x1xf32>
    %cst_9 = arith.constant dense<0xFF800000> : vector<16xf32>
    %11 = vector.multi_reduction <maximumf>, %9, %cst_9 [1] : vector<16x512xf32> to vector<16xf32>
    %12 = vector.shape_cast %11 : vector<16xf32> to vector<16x1xf32>
    %13 = arith.maximumf %10, %12 : vector<16x1xf32>
    %14 = arith.subf %10, %13 : vector<16x1xf32>
    %15 = math.exp %14 : vector<16x1xf32>
    %c0_10 = arith.constant 0 : index
    %c0_11 = arith.constant 0 : index
    %16 = vector.load %arg8[%c0_10, %c0_11] : memref<16x1xf32, #tpu.memory_space<vmem>>, vector<16x1xf32>
    %17 = arith.mulf %15, %16 : vector<16x1xf32>
    %18 = vector.broadcast %13 : vector<16x1xf32> to vector<16x512xf32>
    %19 = arith.subf %9, %18 : vector<16x512xf32>
    %20 = math.exp %19 : vector<16x512xf32>
    %cst_12 = arith.constant dense<0.000000e+00> : vector<16xf32>
    %21 = vector.multi_reduction <add>, %20, %cst_12 [1] : vector<16x512xf32> to vector<16xf32>
    %22 = vector.shape_cast %21 : vector<16xf32> to vector<16x1xf32>
    %23 = arith.addf %17, %22 : vector<16x1xf32>
    %c0_13 = arith.constant 0 : index
    %c0_14 = arith.constant 0 : index
    %24 = vector.load %arg8[%c0_13, %c0_14] : memref<16x1xf32, #tpu.memory_space<vmem>>, vector<16x1xf32>
    tpu.vector_store %arg8[%c0_13, %c0_14], %23 {strides = array<i32>} : memref<16x1xf32, #tpu.memory_space<vmem>>, vector<16x1xf32>,
    %c0_15 = arith.constant 0 : index
    %c0_16 = arith.constant 0 : index
    %25 = vector.load %arg7[%c0_15, %c0_16] : memref<16x1xf32, #tpu.memory_space<vmem>>, vector<16x1xf32>
    tpu.vector_store %arg7[%c0_15, %c0_16], %13 {strides = array<i32>} : memref<16x1xf32, #tpu.memory_space<vmem>>, vector<16x1xf32>,
    %c0_17 = arith.constant 0 : index
    %c0_18 = arith.constant 0 : index
    %26 = vector.load %arg5[%c0_17, %c0_18] : memref<16x512xf32, #tpu.memory_space<vmem>>, vector<16x512xf32>
    tpu.vector_store %arg5[%c0_17, %c0_18], %9 {strides = array<i32>} : memref<16x512xf32, #tpu.memory_space<vmem>>, vector<16x512xf32>,
    %c1_i32 = arith.constant 1 : i32
    %27 = arith.cmpi eq, %arg1, %c1_i32 : i32
    %28 = arith.extui %27 : i1 to i32
    %c0_i32_19 = arith.constant 0 : i32
    %29 = arith.cmpi ne, %28, %c0_i32_19 : i32
    scf.if %29 {
      %c0_20 = arith.constant 0 : index
      %c0_21 = arith.constant 0 : index
      %30 = vector.load %arg7[%c0_20, %c0_21] : memref<16x1xf32, #tpu.memory_space<vmem>>, vector<16x1xf32>
      %c0_22 = arith.constant 0 : index
      %c0_23 = arith.constant 0 : index
      %31 = vector.load %arg8[%c0_22, %c0_23] : memref<16x1xf32, #tpu.memory_space<vmem>>, vector<16x1xf32>
      %32 = math.log %31 : vector<16x1xf32>
      %33 = arith.addf %30, %32 : vector<16x1xf32>
      %c0_24 = arith.constant 0 : index
      %c0_25 = arith.constant 0 : index
      %34 = vector.load %arg6[%c0_24, %c0_25] : memref<16x1xf32, #tpu.memory_space<vmem>>, vector<16x1xf32>
      tpu.vector_store %arg6[%c0_24, %c0_25], %33 {strides = array<i32>} : memref<16x1xf32, #tpu.memory_space<vmem>>, vector<16x1xf32>,
    } else {
    }
    return
  }
  func.func @transform_0(%arg0: i32, %arg1: i32) -> (i32, i32) {
    %c0_i32 = arith.constant 0 : i32
    %c0_i32_0 = arith.constant 0 : i32
    return %arg0, %c0_i32 : i32, i32
  }
  func.func @transform_1(%arg0: i32, %arg1: i32) -> (i32, i32, i32) {
    %c0_i32 = arith.constant 0 : i32
    %c0_i32_0 = arith.constant 0 : i32
    %c0_i32_1 = arith.constant 0 : i32
    return %arg1, %c0_i32, %c0_i32_0 : i32, i32, i32
  }
  func.func @transform_2(%arg0: i32, %arg1: i32) -> (i32, i32) {
    %c0_i32 = arith.constant 0 : i32
    %c0_i32_0 = arith.constant 0 : i32
    return %c0_i32, %arg1 : i32, i32
  }
  func.func @transform_3(%arg0: i32, %arg1: i32) -> (i32, i32) {
    %c0_i32 = arith.constant 0 : i32
    return %arg0, %arg1 : i32, i32
  }
  func.func @transform_4(%arg0: i32, %arg1: i32) -> (i32, i32) {
    %c0_i32 = arith.constant 0 : i32
    %c0_i32_0 = arith.constant 0 : i32
    return %arg0, %c0_i32 : i32, i32
  }
}

</mosaic_0001>

<llo_original>
// kernel: generator_forward.3
$region0: #{generator_forward.3}
  #allocation0 [shape = 'u32[]', space=smem, size = 0x4, offset = 0x4, fixed_abs, tag = 'smem constant byte address 0x4 - core index']
  #allocation1 [shape = 'u32[144,128]{1,0:T(1,128)}', space=vmem, size = 0x12000, scoped, tag = 'internal scratch']
  %s0 = inlined_call_operand.hbm [shape: f32[16,1024], index: 0, kind: input, shape index: {}, may-alias: {0,2}]
  %s1 = inlined_call_operand.hbm [shape: f32[16,1], index: 1, kind: input, shape index: {}]
  %s2 = inlined_call_operand.hbm [shape: f32[16,1024], index: 2, kind: output, shape index: {}, may-alias: {0,2}]
  %s3 = sld [smem:[#allocation0]]
  $region49: #{generator_forward.3} parent=0
    _
  %s5 = ssub.s32 1, %s3
  %s6 = scalar_select 0, %s5, %s3
  $region1: #{generator_forward.3} parent=0
    #allocation2 [shape = 'u8[65536]{0}', space=vmem, size = 0x10000, scoped, tag = 'input window, operand 0']
    #allocation3 [shape = 's32[2]{0}', space=sflag, size = 0x8, scoped, tag = 'scoped memory for generator_forward.3']
    #allocation4 [shape = 's32[2]{0}', space=sflag, size = 0x8, scoped, tag = 'scoped memory for generator_forward.3']
    #allocation5 [shape = 'u8[8192]{0}', space=vmem, size = 0x2000, scoped, tag = 'input window, operand 1, single buffered']
    #allocation6 [shape = 's32[1]{0}', space=sflag, size = 0x4, scoped, tag = 'scoped memory for generator_forward.3']
    #allocation7 [shape = 'u8[65536]{0}', space=vmem, size = 0x10000, scoped, tag = 'output window, operand 0']
    %7 = vsyncpa [#allocation3], 0
    %s8 = scalar_lea.sflag [#allocation3], 1
    %9 = vsyncpa %s8, 0
    %10 = vsyncpa [#allocation6], 0
    %11 = vsyncpa [#allocation4], 0
    %s12 = scalar_lea.sflag [#allocation4], 1
    %13 = vsyncpa %s12, 0
    loop: start=0, step=1, limit=4
    $region2: #{generator_forward.3} parent=1 // loop_pre_header
      _
    $region3: #{generator_forward.3} parent=1 // loop_header
      %s15 = sphi 0, %s19
      %p16 = scmp.ge.s32.totalorder %s15, 4
      %s22 = sphi 0, %s34
      %s23 = sphi 0, %s30
      %s24 = sphi 0, %s22
      %s25 = sphi 0, %s23
      %s26 = sphi 0, %s24
      %s27 = sphi 0, %s25
      %s39 = sphi 0, %s41
      %s42 = sphi 0, %s39
      %s43 = sphi 0, %s42
      %s59 = sphi 0, %s43
      %s65 = sphi 0, %s67
      %s68 = sphi 0, %s65
      %s69 = sphi 0, %s68
      %s85 = sphi 0, %s69
      %s93 = sphi 0, %s95
      %s96 = sphi 0, %s93
      %s97 = sphi 0, %s96
      %s113 = sphi 0, %s97
    $region4: #{generator_forward.3} parent=1 // loop_header_branch
      %18 = sbr.rel (%p16) target = $region8
    $region5: #{generator_forward.3} parent=1 // loop_body
      %s20 = ssub.s32 %s15, 1
      %s21 = ssub.s32 %s15, 2
      %s28 = sadd.s32 1, %s23
      %p29 = scmp.ge.s32.totalorder %s28, 2
      %s30 = scalar_select %p29, 0, %s28
      %s31 = sadd.s32 1, %s22
      %s32 = scalar_select %p29, %s31, %s22
      %p33 = scmp.ge.s32.totalorder %s32, 1
      %s34 = scalar_select %p33, 0, %s32
      %s35 = ssub.s32 %s22, %s34
      %s36 = ssub.s32 %s23, %s30
      %s37 = sor.u32 %s35, %s36
      %p38 = scmp.eq.s32.totalorder %s37, 0
      %s40 = sadd.s32 %s39, 1
      %s41 = scalar_select %p38, %s39, %s40
      %p44 = pneg %p38
      %p45 = scmp.eq.s32.totalorder %s15, 1
      %p46 = por %p44, %p45
      %p47 = scmp.ne.s32.totalorder %s39, %s42
      %p48 = scmp.eq.s32.totalorder %s15, 0
      %p49 = por %p47, %p48
      %p50 = scmp.ne.s32.totalorder %s39, %s42
      %p51 = scmp.eq.s32.totalorder %s20, 1
      %p52 = por %p50, %p51
      %p53 = scmp.ne.s32.totalorder %s42, %s43
      %p54 = scmp.eq.s32.totalorder %s20, 0
      %p55 = por %p53, %p54
      %p56 = scmp.ne.s32.totalorder %s42, %s43
      %p57 = scmp.eq.s32.totalorder %s21, 1
      %p58 = por %p56, %p57
      %p60 = scmp.ne.s32.totalorder %s43, %s59
      %p61 = scmp.eq.s32.totalorder %s21, 0
      %p62 = por %p60, %p61
      %s63 = ssub.s32 %s22, %s34
      %p64 = scmp.eq.s32.totalorder %s63, 0
      %s66 = sadd.s32 %s65, 1
      %s67 = scalar_select %p64, %s65, %s66
      %p70 = pneg %p64
      %p71 = scmp.eq.s32.totalorder %s15, 1
      %p72 = por %p70, %p71
      %p73 = scmp.ne.s32.totalorder %s65, %s68
      %p74 = scmp.eq.s32.totalorder %s15, 0
      %p75 = por %p73, %p74
      %p76 = scmp.ne.s32.totalorder %s65, %s68
      %p77 = scmp.eq.s32.totalorder %s20, 1
      %p78 = por %p76, %p77
      %p79 = scmp.ne.s32.totalorder %s68, %s69
      %p80 = scmp.eq.s32.totalorder %s20, 0
      %p81 = por %p79, %p80
      %p82 = scmp.ne.s32.totalorder %s68, %s69
      %p83 = scmp.eq.s32.totalorder %s21, 1
      %p84 = por %p82, %p83
      %p86 = scmp.ne.s32.totalorder %s69, %s85
      %p87 = scmp.eq.s32.totalorder %s21, 0
      %p88 = por %p86, %p87
      %s89 = ssub.s32 %s22, %s34
      %s90 = ssub.s32 %s23, %s30
      %s91 = sor.u32 %s89, %s90
      %p92 = scmp.eq.s32.totalorder %s91, 0
      %s94 = sadd.s32 %s93, 1
      %s95 = scalar_select %p92, %s93, %s94
      %p98 = pneg %p92
      %p99 = scmp.eq.s32.totalorder %s15, 1
      %p100 = por %p98, %p99
      %p101 = scmp.ne.s32.totalorder %s93, %s96
      %p102 = scmp.eq.s32.totalorder %s15, 0
      %p103 = por %p101, %p102
      %p104 = scmp.ne.s32.totalorder %s93, %s96
      %p105 = scmp.eq.s32.totalorder %s20, 1
      %p106 = por %p104, %p105
      %p107 = scmp.ne.s32.totalorder %s96, %s97
      %p108 = scmp.eq.s32.totalorder %s20, 0
      %p109 = por %p107, %p108
      %p110 = scmp.ne.s32.totalorder %s96, %s97
      %p111 = scmp.eq.s32.totalorder %s21, 1
      %p112 = por %p110, %p111
      %p114 = scmp.ne.s32.totalorder %s97, %s113
      %p115 = scmp.eq.s32.totalorder %s21, 0
      %p116 = por %p114, %p115
      %p117 = scmp.le.s32.totalorder 1, %s15
      %p118 = scmp.lt.s32.totalorder %s15, 3
      %p119 = pnand %p117, %p118
      %p120 = pneg %p119
      // Predicated region
      $region9: #{generator_forward.3} parent=5 // pred_check
        _
      $region10: #{generator_forward.3} parent=5 // pred_check_branch
        %122 = sbr.rel (%p119) target = $region12
      $region11: #{generator_forward.3} parent=5 // pred_region
        %s123 = ssub.s32 %s15, 1
        // Predicated region
        $region13: #{generator_forward.3} parent=11 // pred_check
          %p124 = pneg %p81
        $region14: #{generator_forward.3} parent=11 // pred_check_branch
          %126 = sbr.rel (%p124) target = $region16
        $region15: #{generator_forward.3} parent=11 // pred_region
          %s127 = smul.u32 2, %s24
          %s129 = ssub.s32 256, 256
          %130 = vsyncadd [#allocation6], %s129
          %s131 = smul.addr %s127, 128
          %s132 = scalar_lea.hbm %s1, %s131
          %s133 = sshll.u32 [#allocation5], 4
          %s134 = int_to_ptr.vmem [resolvable:$true] %s133
          %139 = dma.hbm_to_vmem [thread:$0]  %s132, 256, %s134, [#allocation6], 128, 128, 8
        $region16: #{generator_forward.3} parent=11 // pred_fallthru
          _
      $region12: #{generator_forward.3} parent=5 // pred_fallthru
        _
      %p140 = scmp.lt.s32.totalorder %s15, 2
      // Predicated region
      $region17: #{generator_forward.3} parent=5 // pred_check
        %p141 = pneg %p140
      $region18: #{generator_forward.3} parent=5 // pred_check_branch
        %143 = sbr.rel (%p141) target = $region20
      $region19: #{generator_forward.3} parent=5 // pred_region
        // Predicated region
        $region21: #{generator_forward.3} parent=19 // pred_check
          %p144 = pneg %p49
        $region22: #{generator_forward.3} parent=19 // pred_check_branch
          %146 = sbr.rel (%p144) target = $region24
        $region23: #{generator_forward.3} parent=19 // pred_region
          %s147 = sand.u32 %s39, 1
          %s148 = scalar_lea.sflag [#allocation3], %s147
          %s149 = sand.u32 %s39, 1
          %s150 = smul.addr %s149, 64
          %s151 = scalar_lea.vmem [#allocation2], %s150
          %s152 = smul.u32 2, %s22
          %s153 = smul.u32 4, %s23
          %s155 = ssub.s32 1024, 1024
          %156 = vsyncadd %s148, %s155
          %s157 = smul.addr %s152, 8
          %s158 = sadd.s32 %s153, %s157
          %s159 = smul.addr %s158, 128
          %s160 = scalar_lea.hbm %s0, %s159
          %s161 = sshll.u32 %s151, 4
          %s162 = int_to_ptr.vmem [resolvable:$true] %s161
          %167 = dma.hbm_to_vmem [thread:$0]  %s160, 1024, %s162, %s148, 1024, 512, 32
        $region24: #{generator_forward.3} parent=19 // pred_fallthru
          _
      $region20: #{generator_forward.3} parent=5 // pred_fallthru
        _
      %p168 = scmp.le.s32.totalorder 1, %s15
      %p169 = scmp.lt.s32.totalorder %s15, 3
      %p170 = pnand %p168, %p169
      %p171 = pneg %p170
      // Predicated region
      $region25: #{generator_forward.3} parent=5 // pred_check
        _
      $region26: #{generator_forward.3} parent=5 // pred_check_branch
        %173 = sbr.rel (%p170) target = $region28
      $region27: #{generator_forward.3} parent=5 // pred_region
        %s174 = ssub.s32 %s15, 1
        %s175 = sand.u32 %s42, 1
        %s176 = scalar_lea.sflag [#allocation3], %s175
        %s177 = sand.u32 %s42, 1
        %s178 = smul.addr %s177, 64
        %s179 = scalar_lea.vmem [#allocation2], %s178
        // Predicated region
        $region29: #{generator_forward.3} parent=27 // pred_check
          %p180 = pneg %p55
        $region30: #{generator_forward.3} parent=27 // pred_check_branch
          %182 = sbr.rel (%p180) target = $region32
        $region31: #{generator_forward.3} parent=27 // pred_region
          %183 = dma.done %s176, 1024
        $region32: #{generator_forward.3} parent=27 // pred_fallthru
          _
        // Predicated region
        $region33: #{generator_forward.3} parent=27 // pred_check
          %p184 = pneg %p81
        $region34: #{generator_forward.3} parent=27 // pred_check_branch
          %186 = sbr.rel (%p184) target = $region36
        $region35: #{generator_forward.3} parent=27 // pred_region
          %187 = dma.done [#allocation6], 256
        $region36: #{generator_forward.3} parent=27 // pred_fallthru
          _
        %s188 = sand.u32 %s42, 1
        %s189 = scalar_lea.sflag [#allocation3], %s188
        %s190 = sand.u32 %s42, 1
        %s191 = smul.addr %s190, 64
        %s192 = scalar_lea.vmem [#allocation2], %s191
        %p193 = pneg %p55
        %p194 = pneg %p52
        %p195 = pneg %p81
        %p196 = pneg %p78
        %p197 = pneg %p109
        %p198 = pneg %p106
        %s199 = sand.u32 %s96, 1
        %s200 = scalar_lea.sflag [#allocation4], %s199
        %s201 = sand.u32 %s96, 1
        %s202 = smul.addr %s201, 64
        %s203 = scalar_lea.vmem [#allocation7], %s202
        %s204 = smul.u32 2, %s24
        %s205 = smul.u32 4, %s25
        %s206 = smul.u32 2, %s24
        %s207 = smul.u32 2, %s24
        %s208 = smul.u32 4, %s25
        %v209 = vld [vmem:[%s179] sm:$0xff]
        %v210 = vld [vmem:[%s179 + $0x8] sm:$0xff]
        %v211 = vld [vmem:[%s179 + $0x10] sm:$0xff]
        %v212 = vld [vmem:[%s179 + $0x18] sm:$0xff]
        %v213 = vld [vmem:[%s179 + $0x20] sm:$0xff]
        %v214 = vld [vmem:[%s179 + $0x28] sm:$0xff]
        %v215 = vld [vmem:[%s179 + $0x30] sm:$0xff]
        %v216 = vld [vmem:[%s179 + $0x38] sm:$0xff]
        %v217 = vld [vmem:[#allocation5] sm:$0xff]
        %v218 = vld [vmem:[#allocation5 + $0x8] sm:$0xff]
        %220 = vset.pattern.permute.xlu0 0
        %221 = vperm.xlu0 %220, %v217
        %v222 = vpop.permute.xlu0 %221
        %225 = vset.pattern.permute.xlu0 0
        %226 = vperm.xlu0 %225, %v218
        %v227 = vpop.permute.xlu0 %226
        %v229 = vsub.f32 %v209, %v222
        %v230 = vsub.f32 %v210, %v222
        %v231 = vsub.f32 %v211, %v222
        %v232 = vsub.f32 %v212, %v222
        %v233 = vsub.f32 %v213, %v227
        %v234 = vsub.f32 %v214, %v227
        %v235 = vsub.f32 %v215, %v227
        %v236 = vsub.f32 %v216, %v227
        %237 = vst [vmem:[%s203] sm:$0xff] %v229
        %238 = vst [vmem:[%s203 + $0x8] sm:$0xff] %v230
        %239 = vst [vmem:[%s203 + $0x10] sm:$0xff] %v231
        %240 = vst [vmem:[%s203 + $0x18] sm:$0xff] %v232
        %241 = vst [vmem:[%s203 + $0x20] sm:$0xff] %v233
        %242 = vst [vmem:[%s203 + $0x28] sm:$0xff] %v234
        %243 = vst [vmem:[%s203 + $0x30] sm:$0xff] %v235
        %244 = vst [vmem:[%s203 + $0x38] sm:$0xff] %v236
        %s245 = sand.u32 %s96, 1
        %s246 = scalar_lea.sflag [#allocation4], %s245
        %s247 = sand.u32 %s96, 1
        %s248 = smul.addr %s247, 64
        %s249 = scalar_lea.vmem [#allocation7], %s248
        // Predicated region
        $region37: #{generator_forward.3} parent=27 // pred_check
          %p250 = pneg %p106
        $region38: #{generator_forward.3} parent=27 // pred_check_branch
          %252 = sbr.rel (%p250) target = $region40
        $region39: #{generator_forward.3} parent=27 // pred_region
          %s253 = smul.u32 2, %s24
          %s254 = smul.u32 4, %s25
          %s256 = ssub.s32 1024, 1024
          %257 = vsyncadd %s246, %s256
          %s258 = smul.addr %s253, 8
          %s259 = sadd.s32 %s254, %s258
          %s260 = smul.addr %s259, 128
          %s261 = scalar_lea.hbm %s2, %s260
          %s262 = sshll.u32 %s249, 4
          %s263 = int_to_ptr.vmem [resolvable:$true] %s262
          %268 = dma.vmem_to_hbm [thread:$0]  %s263, 1024, %s261, %s246, 512, 1024, 32
        $region40: #{generator_forward.3} parent=27 // pred_fallthru
          _
      $region28: #{generator_forward.3} parent=5 // pred_fallthru
        _
      %p269 = scmp.le.s32.totalorder 2, %s15
      // Predicated region
      $region41: #{generator_forward.3} parent=5 // pred_check
        %p270 = pneg %p269
      $region42: #{generator_forward.3} parent=5 // pred_check_branch
        %272 = sbr.rel (%p270) target = $region44
      $region43: #{generator_forward.3} parent=5 // pred_region
        %s273 = ssub.s32 %s15, 2
        // Predicated region
        $region45: #{generator_forward.3} parent=43 // pred_check
          %p274 = pneg %p112
        $region46: #{generator_forward.3} parent=43 // pred_check_branch
          %276 = sbr.rel (%p274) target = $region48
        $region47: #{generator_forward.3} parent=43 // pred_region
          %s277 = sand.u32 %s97, 1
          %s278 = scalar_lea.sflag [#allocation4], %s277
          %s279 = sand.u32 %s97, 1
          %s280 = smul.addr %s279, 64
          %s281 = scalar_lea.vmem [#allocation7], %s280
          %282 = dma.done %s278, 1024
        $region48: #{generator_forward.3} parent=43 // pred_fallthru
          _
      $region44: #{generator_forward.3} parent=5 // pred_fallthru
        _
    $region6: #{generator_forward.3} parent=1 // loop_footer
      %s19 = sadd.s32 1, %s15
    $region7: #{generator_forward.3} parent=1 // loop_footer_branch
      %14 = sbr.rel target = $region3
    $region8: #{generator_forward.3} parent=1 // loop_exit
      _
    %283 = vsyncpa [#allocation3], 1
    %s284 = scalar_lea.sflag [#allocation3], 1
    %285 = vsyncpa %s284, 1
    %286 = vsyncpa [#allocation6], 1
    %287 = vsyncpa [#allocation4], 1
    %s288 = scalar_lea.sflag [#allocation4], 1
    %289 = vsyncpa %s288, 1

// kernel: generator_forward.2
$region0: #{generator_forward.2}
  #allocation0 [shape = 'u32[]', space=smem, size = 0x4, offset = 0x4, fixed_abs, tag = 'smem constant byte address 0x4 - core index']
  #allocation1 [shape = 'u32[144,128]{1,0:T(1,128)}', space=vmem, size = 0x12000, scoped, tag = 'internal scratch']
  #allocation2 [shape = 'f32[16,1]{1,0:T(8,128)}', space=vmem, size = 0x2000, scoped, tag = 'scratch operand']
  #allocation3 [shape = 'f32[16,1]{1,0:T(8,128)}', space=vmem, size = 0x2000, scoped, tag = 'scratch operand']
  %s0 = inlined_call_operand.hbm [shape: bf16[16,32], index: 0, kind: input, shape index: {}]
  %s1 = inlined_call_operand.hbm [shape: bf16[2,32,512], index: 1, kind: input, shape index: {}]
  %s2 = inlined_call_operand.hbm [shape: f32[1,1024], index: 2, kind: input, shape index: {}]
  %s3 = inlined_call_operand.hbm [shape: f32[16,1024], index: 3, kind: output, shape index: {0}]
  %s4 = inlined_call_operand.hbm [shape: f32[16,1], index: 4, kind: output, shape index: {1}]
  %5 = xla_tuple %s3, %s4
  %s6 = sld [smem:[#allocation0]]
  $region73: #{generator_forward.2} parent=0
    _
  %s8 = ssub.s32 1, %s6
  %s9 = scalar_select 0, %s8, %s6
  $region1: #{generator_forward.2} parent=0
    #allocation4 [shape = 'u8[4096]{0}', space=vmem, size = 0x1000, scoped, tag = 'input window, operand 0, single buffered']
    #allocation5 [shape = 's32[2]{0}', space=sflag, size = 0x8, scoped, tag = 'scoped memory for generator_forward.2']
    #allocation6 [shape = 's32[2]{0}', space=sflag, size = 0x8, scoped, tag = 'scoped memory for generator_forward.2']
    #allocation7 [shape = 'u8[65536]{0}', space=vmem, size = 0x10000, scoped, tag = 'input window, operand 1']
    #allocation8 [shape = 's32[2]{0}', space=sflag, size = 0x8, scoped, tag = 'scoped memory for generator_forward.2']
    #allocation9 [shape = 'u8[4096]{0}', space=vmem, size = 0x1000, scoped, tag = 'input window, operand 2']
    #allocation10 [shape = 'u8[65536]{0}', space=vmem, size = 0x10000, scoped, tag = 'output window, operand 0']
    #allocation11 [shape = 'u8[8192]{0}', space=vmem, size = 0x2000, scoped, tag = 'output window, operand 1, single buffered']
    #allocation12 [shape = 's32[1]{0}', space=sflag, size = 0x4, scoped, tag = 'scoped memory for generator_forward.2']
    %10 = vsyncpa [#allocation5], 0
    %11 = vsyncpa [#allocation8], 0
    %s12 = scalar_lea.sflag [#allocation8], 1
    %13 = vsyncpa %s12, 0
    %14 = vsyncpa [#allocation6], 0
    %s15 = scalar_lea.sflag [#allocation6], 1
    %16 = vsyncpa %s15, 0
    %17 = vsyncpa [#allocation12], 0
    loop: start=0, step=1, limit=4
    $region2: #{generator_forward.2} parent=1 // loop_pre_header
      _
    $region3: #{generator_forward.2} parent=1 // loop_header
      %s19 = sphi 0, %s23
      %p20 = scmp.ge.s32.totalorder %s19, 4
      %s26 = sphi 0, %s38
      %s27 = sphi 0, %s34
      %s28 = sphi 0, %s26
      %s29 = sphi 0, %s27
      %s30 = sphi 0, %s28
      %s31 = sphi 0, %s29
      %s41 = sphi 0, %s43
      %s44 = sphi 0, %s41
      %s45 = sphi 0, %s44
      %s61 = sphi 0, %s45
      %s67 = sphi 0, %s69
      %s70 = sphi 0, %s67
      %s71 = sphi 0, %s70
      %s87 = sphi 0, %s71
      %s93 = sphi 0, %s95
      %s96 = sphi 0, %s93
      %s97 = sphi 0, %s96
      %s113 = sphi 0, %s97
      %s121 = sphi 0, %s123
      %s124 = sphi 0, %s121
      %s125 = sphi 0, %s124
      %s141 = sphi 0, %s125
      %s147 = sphi 0, %s149
      %s150 = sphi 0, %s147
      %s151 = sphi 0, %s150
      %s167 = sphi 0, %s151
    $region4: #{generator_forward.2} parent=1 // loop_header_branch
      %22 = sbr.rel (%p20) target = $region8
    $region5: #{generator_forward.2} parent=1 // loop_body
      %s24 = ssub.s32 %s19, 1
      %s25 = ssub.s32 %s19, 2
      %s32 = sadd.s32 1, %s27
      %p33 = scmp.ge.s32.totalorder %s32, 2
      %s34 = scalar_select %p33, 0, %s32
      %s35 = sadd.s32 1, %s26
      %s36 = scalar_select %p33, %s35, %s26
      %p37 = scmp.ge.s32.totalorder %s36, 1
      %s38 = scalar_select %p37, 0, %s36
      %s39 = ssub.s32 %s26, %s38
      %p40 = scmp.eq.s32.totalorder %s39, 0
      %s42 = sadd.s32 %s41, 1
      %s43 = scalar_select %p40, %s41, %s42
      %p46 = pneg %p40
      %p47 = scmp.eq.s32.totalorder %s19, 1
      %p48 = por %p46, %p47
      %p49 = scmp.ne.s32.totalorder %s41, %s44
      %p50 = scmp.eq.s32.totalorder %s19, 0
      %p51 = por %p49, %p50
      %p52 = scmp.ne.s32.totalorder %s41, %s44
      %p53 = scmp.eq.s32.totalorder %s24, 1
      %p54 = por %p52, %p53
      %p55 = scmp.ne.s32.totalorder %s44, %s45
      %p56 = scmp.eq.s32.totalorder %s24, 0
      %p57 = por %p55, %p56
      %p58 = scmp.ne.s32.totalorder %s44, %s45
      %p59 = scmp.eq.s32.totalorder %s25, 1
      %p60 = por %p58, %p59
      %p62 = scmp.ne.s32.totalorder %s45, %s61
      %p63 = scmp.eq.s32.totalorder %s25, 0
      %p64 = por %p62, %p63
      %s65 = ssub.s32 %s27, %s34
      %p66 = scmp.eq.s32.totalorder %s65, 0
      %s68 = sadd.s32 %s67, 1
      %s69 = scalar_select %p66, %s67, %s68
      %p72 = pneg %p66
      %p73 = scmp.eq.s32.totalorder %s19, 1
      %p74 = por %p72, %p73
      %p75 = scmp.ne.s32.totalorder %s67, %s70
      %p76 = scmp.eq.s32.totalorder %s19, 0
      %p77 = por %p75, %p76
      %p78 = scmp.ne.s32.totalorder %s67, %s70
      %p79 = scmp.eq.s32.totalorder %s24, 1
      %p80 = por %p78, %p79
      %p81 = scmp.ne.s32.totalorder %s70, %s71
      %p82 = scmp.eq.s32.totalorder %s24, 0
      %p83 = por %p81, %p82
      %p84 = scmp.ne.s32.totalorder %s70, %s71
      %p85 = scmp.eq.s32.totalorder %s25, 1
      %p86 = por %p84, %p85
      %p88 = scmp.ne.s32.totalorder %s71, %s87
      %p89 = scmp.eq.s32.totalorder %s25, 0
      %p90 = por %p88, %p89
      %s91 = ssub.s32 %s27, %s34
      %p92 = scmp.eq.s32.totalorder %s91, 0
      %s94 = sadd.s32 %s93, 1
      %s95 = scalar_select %p92, %s93, %s94
      %p98 = pneg %p92
      %p99 = scmp.eq.s32.totalorder %s19, 1
      %p100 = por %p98, %p99
      %p101 = scmp.ne.s32.totalorder %s93, %s96
      %p102 = scmp.eq.s32.totalorder %s19, 0
      %p103 = por %p101, %p102
      %p104 = scmp.ne.s32.totalorder %s93, %s96
      %p105 = scmp.eq.s32.totalorder %s24, 1
      %p106 = por %p104, %p105
      %p107 = scmp.ne.s32.totalorder %s96, %s97
      %p108 = scmp.eq.s32.totalorder %s24, 0
      %p109 = por %p107, %p108
      %p110 = scmp.ne.s32.totalorder %s96, %s97
      %p111 = scmp.eq.s32.totalorder %s25, 1
      %p112 = por %p110, %p111
      %p114 = scmp.ne.s32.totalorder %s97, %s113
      %p115 = scmp.eq.s32.totalorder %s25, 0
      %p116 = por %p114, %p115
      %s117 = ssub.s32 %s26, %s38
      %s118 = ssub.s32 %s27, %s34
      %s119 = sor.u32 %s117, %s118
      %p120 = scmp.eq.s32.totalorder %s119, 0
      %s122 = sadd.s32 %s121, 1
      %s123 = scalar_select %p120, %s121, %s122
      %p126 = pneg %p120
      %p127 = scmp.eq.s32.totalorder %s19, 1
      %p128 = por %p126, %p127
      %p129 = scmp.ne.s32.totalorder %s121, %s124
      %p130 = scmp.eq.s32.totalorder %s19, 0
      %p131 = por %p129, %p130
      %p132 = scmp.ne.s32.totalorder %s121, %s124
      %p133 = scmp.eq.s32.totalorder %s24, 1
      %p134 = por %p132, %p133
      %p135 = scmp.ne.s32.totalorder %s124, %s125
      %p136 = scmp.eq.s32.totalorder %s24, 0
      %p137 = por %p135, %p136
      %p138 = scmp.ne.s32.totalorder %s124, %s125
      %p139 = scmp.eq.s32.totalorder %s25, 1
      %p140 = por %p138, %p139
      %p142 = scmp.ne.s32.totalorder %s125, %s141
      %p143 = scmp.eq.s32.totalorder %s25, 0
      %p144 = por %p142, %p143
      %s145 = ssub.s32 %s26, %s38
      %p146 = scmp.eq.s32.totalorder %s145, 0
      %s148 = sadd.s32 %s147, 1
      %s149 = scalar_select %p146, %s147, %s148
      %p152 = pneg %p146
      %p153 = scmp.eq.s32.totalorder %s19, 1
      %p154 = por %p152, %p153
      %p155 = scmp.ne.s32.totalorder %s147, %s150
      %p156 = scmp.eq.s32.totalorder %s19, 0
      %p157 = por %p155, %p156
      %p158 = scmp.ne.s32.totalorder %s147, %s150
      %p159 = scmp.eq.s32.totalorder %s24, 1
      %p160 = por %p158, %p159
      %p161 = scmp.ne.s32.totalorder %s150, %s151
      %p162 = scmp.eq.s32.totalorder %s24, 0
      %p163 = por %p161, %p162
      %p164 = scmp.ne.s32.totalorder %s150, %s151
      %p165 = scmp.eq.s32.totalorder %s25, 1
      %p166 = por %p164, %p165
      %p168 = scmp.ne.s32.totalorder %s151, %s167
      %p169 = scmp.eq.s32.totalorder %s25, 0
      %p170 = por %p168, %p169
      %p171 = scmp.le.s32.totalorder 1, %s19
      %p172 = scmp.lt.s32.totalorder %s19, 3
      %p173 = pnand %p171, %p172
      %p174 = pneg %p173
      // Predicated region
      $region9: #{generator_forward.2} parent=5 // pred_check
        _
      $region10: #{generator_forward.2} parent=5 // pred_check_branch
        %176 = sbr.rel (%p173) target = $region12
      $region11: #{generator_forward.2} parent=5 // pred_region
        %s177 = ssub.s32 %s19, 1
        // Predicated region
        $region13: #{generator_forward.2} parent=11 // pred_check
          %p178 = pneg %p57
        $region14: #{generator_forward.2} parent=11 // pred_check_branch
          %180 = sbr.rel (%p178) target = $region16
        $region15: #{generator_forward.2} parent=11 // pred_region
          %s181 = smul.u32 2, %s28
          %s183 = ssub.s32 128, 128
          %184 = vsyncadd [#allocation5], %s183
          %s185 = smul.addr %s181, 64
          %s186 = scalar_lea.hbm %s0, %s185
          %s187 = sshll.u32 [#allocation4], 4
          %s188 = int_to_ptr.vmem [resolvable:$true] %s187
          %193 = dma.hbm_to_vmem [thread:$0]  %s186, 128, %s188, [#allocation5], 64, 64, 4
        $region16: #{generator_forward.2} parent=11 // pred_fallthru
          _
      $region12: #{generator_forward.2} parent=5 // pred_fallthru
        _
      %p194 = scmp.lt.s32.totalorder %s19, 2
      // Predicated region
      $region17: #{generator_forward.2} parent=5 // pred_check
        %p195 = pneg %p194
      $region18: #{generator_forward.2} parent=5 // pred_check_branch
        %197 = sbr.rel (%p195) target = $region20
      $region19: #{generator_forward.2} parent=5 // pred_region
        // Predicated region
        $region21: #{generator_forward.2} parent=19 // pred_check
          %p198 = pneg %p77
        $region22: #{generator_forward.2} parent=19 // pred_check_branch
          %200 = sbr.rel (%p198) target = $region24
        $region23: #{generator_forward.2} parent=19 // pred_region
          %s201 = sand.u32 %s19, 1
          %s202 = scalar_lea.sflag [#allocation8], %s201
          %s203 = sand.u32 %s67, 1
          %s204 = smul.addr %s203, 64
          %s205 = scalar_lea.vmem [#allocation7], %s204
          %s207 = ssub.s32 1024, 1024
          %208 = vsyncadd %s202, %s207
          %s209 = smul.addr %s27, 16
          %s210 = smul.addr %s209, 64
          %s211 = scalar_lea.hbm %s1, %s210
          %s212 = sshll.u32 %s205, 4
          %s213 = int_to_ptr.vmem [resolvable:$true] %s212
          %218 = dma.hbm_to_vmem [thread:$0]  %s211, 1024, %s213, %s202, 256, 256, 16
        $region24: #{generator_forward.2} parent=19 // pred_fallthru
          _
        // Predicated region
        $region25: #{generator_forward.2} parent=19 // pred_check
          %p219 = pneg %p103
        $region26: #{generator_forward.2} parent=19 // pred_check_branch
          %221 = sbr.rel (%p219) target = $region28
        $region27: #{generator_forward.2} parent=19 // pred_region
          %s222 = sand.u32 %s19, 1
          %s223 = scalar_lea.sflag [#allocation8], %s222
          %s224 = sand.u32 %s93, 1
          %s225 = smul.addr %s224, 4
          %s226 = scalar_lea.vmem [#allocation9], %s225
          %s227 = smul.u32 4, %s27
          %s229 = ssub.s32 64, 64
          %230 = vsyncadd %s223, %s229
          %s231 = smul.addr %s227, 16
          %s232 = scalar_lea.hbm %s2, %s231
          %s234 = sshll.u32 %s226, 4
          %s235 = int_to_ptr.vmem [resolvable:$true] %s234
          %237 = dma.hbm_to_vmem [thread:$0]  %s232, 64, %s235, %s223
        $region28: #{generator_forward.2} parent=19 // pred_fallthru
          _
      $region20: #{generator_forward.2} parent=5 // pred_fallthru
        _
      %p238 = scmp.le.s32.totalorder 1, %s19
      %p239 = scmp.lt.s32.totalorder %s19, 3
      %p240 = pnand %p238, %p239
      %p241 = pneg %p240
      // Predicated region
      $region29: #{generator_forward.2} parent=5 // pred_check
        _
      $region30: #{generator_forward.2} parent=5 // pred_check_branch
        %243 = sbr.rel (%p240) target = $region32
      $region31: #{generator_forward.2} parent=5 // pred_region
        %s244 = ssub.s32 %s19, 1
        // Predicated region
        $region33: #{generator_forward.2} parent=31 // pred_check
          %p245 = pneg %p57
        $region34: #{generator_forward.2} parent=31 // pred_check_branch
          %247 = sbr.rel (%p245) target = $region36
        $region35: #{generator_forward.2} parent=31 // pred_region
          %248 = dma.done [#allocation5], 128
        $region36: #{generator_forward.2} parent=31 // pred_fallthru
          _
        %s249 = sand.u32 %s24, 1
        %s250 = scalar_lea.sflag [#allocation8], %s249
        %s251 = sand.u32 %s70, 1
        %s252 = smul.addr %s251, 64
        %s253 = scalar_lea.vmem [#allocation7], %s252
        // Predicated region
        $region37: #{generator_forward.2} parent=31 // pred_check
          %p254 = pneg %p83
        $region38: #{generator_forward.2} parent=31 // pred_check_branch
          %256 = sbr.rel (%p254) target = $region40
        $region39: #{generator_forward.2} parent=31 // pred_region
          %257 = dma.done %s250, 1024
        $region40: #{generator_forward.2} parent=31 // pred_fallthru
          _
        %s258 = sand.u32 %s24, 1
        %s259 = scalar_lea.sflag [#allocation8], %s258
        %s260 = sand.u32 %s96, 1
        %s261 = smul.addr %s260, 4
        %s262 = scalar_lea.vmem [#allocation9], %s261
        // Predicated region
        $region41: #{generator_forward.2} parent=31 // pred_check
          %p263 = pneg %p109
        $region42: #{generator_forward.2} parent=31 // pred_check_branch
          %265 = sbr.rel (%p263) target = $region44
        $region43: #{generator_forward.2} parent=31 // pred_region
          %266 = dma.done %s259, 64
        $region44: #{generator_forward.2} parent=31 // pred_fallthru
          _
        %p267 = pneg %p57
        %p268 = pneg %p54
        %s269 = sand.u32 %s24, 1
        %s270 = scalar_lea.sflag [#allocation8], %s269
        %s271 = sand.u32 %s70, 1
        %s272 = smul.addr %s271, 64
        %s273 = scalar_lea.vmem [#allocation7], %s272
        %p274 = pneg %p83
        %p275 = pneg %p80
        %s276 = sand.u32 %s24, 1
        %s277 = scalar_lea.sflag [#allocation8], %s276
        %s278 = sand.u32 %s96, 1
        %s279 = smul.addr %s278, 4
        %s280 = scalar_lea.vmem [#allocation9], %s279
        %p281 = pneg %p109
        %p282 = pneg %p106
        %p283 = pneg %p137
        %p284 = pneg %p134
        %s285 = sand.u32 %s124, 1
        %s286 = scalar_lea.sflag [#allocation6], %s285
        %s287 = sand.u32 %s124, 1
        %s288 = smul.addr %s287, 64
        %s289 = scalar_lea.vmem [#allocation10], %s288
        %p290 = pneg %p163
        %p291 = pneg %p160
        %s292 = smul.u32 2, %s28
        %s293 = smul.u32 4, %s29
        %s294 = smul.u32 2, %s28
        %s295 = smul.u32 4, %s29
        %s296 = smul.u32 2, %s28
        %p298 = scmp.eq.s32.totalorder %s29, 0
        // Predicated region
        $region45: #{generator_forward.2} parent=31 // pred_check
          %p299 = pneg %p298
        $region46: #{generator_forward.2} parent=31 // pred_check_branch
          %301 = sbr.rel (%p299) target = $region48
        $region47: #{generator_forward.2} parent=31 // pred_region
          %vm302 = vcmask 7168
          %303 = vst.msk [vmem:[#allocation2] sm:$0xff] %vm302, -inf
          %304 = vst.msk [vmem:[#allocation2 + $0x8] sm:$0xff] %vm302, -inf
          %305 = vst.msk [vmem:[#allocation3] sm:$0xff] %vm302, 0.0
          %306 = vst.msk [vmem:[#allocation3 + $0x8] sm:$0xff] %vm302, 0.0
        $region48: #{generator_forward.2} parent=31 // pred_fallthru
          _
        %v307 = vld [vmem:[#allocation4] sm:$0xf]
        %v308 = vld [vmem:[#allocation4 + $0x4] sm:$0xf]
        %v309 = vld [vmem:[%s253] sm:$0xff]
        %v310 = vld [vmem:[%s253 + $0x8] sm:$0xff]
        %v311 = vld [vmem:[%s253 + $0x10] sm:$0xff]
        %v312 = vld [vmem:[%s253 + $0x18] sm:$0xff]
        %v313 = vld [vmem:[%s253 + $0x20] sm:$0xff]
        %v314 = vld [vmem:[%s253 + $0x28] sm:$0xff]
        %v315 = vld [vmem:[%s253 + $0x30] sm:$0xff]
        %v316 = vld [vmem:[%s253 + $0x38] sm:$0xff]
        %v317 = vld [vmem:[%s262] sm:$0xf]
        %v319 = vlaneseq
        %v320 = vshrl.u32 %v319, 7
        %v321 = vsub.s32 0, %v320
        %v322 = vrot.slane %v317, %v321
        %v323 = vlaneseq
        %v324 = vshrl.u32 %v323, 7
        %v325 = vsub.s32 1, %v324
        %v326 = vrot.slane %v317, %v325
        %v327 = vlaneseq
        %v328 = vshrl.u32 %v327, 7
        %v329 = vsub.s32 2, %v328
        %v330 = vrot.slane %v317, %v329
        %v331 = vlaneseq
        %v332 = vshrl.u32 %v331, 7
        %v333 = vsub.s32 3, %v332
        %v334 = vrot.slane %v317, %v333
        %v341 = vunpack.c.l.b16 %v307
        %v342 = vunpack.c.l.b16 %v308
        %v343 = vpack.c.b16 %v342, %v341
        %v352 = vunpack.c.l.b16 %v309
        %v353 = vunpack.c.h.b16 %v309
        %v354 = vunpack.c.l.b16 %v310
        %v355 = vunpack.c.h.b16 %v310
        %v356 = vunpack.c.l.b16 %v311
        %v357 = vunpack.c.h.b16 %v311
        %v358 = vunpack.c.l.b16 %v312
        %v359 = vunpack.c.h.b16 %v312
        %v360 = vunpack.c.l.b16 %v313
        %v361 = vunpack.c.h.b16 %v313
        %v362 = vunpack.c.l.b16 %v314
        %v363 = vunpack.c.h.b16 %v314
        %v364 = vunpack.c.l.b16 %v315
        %v365 = vunpack.c.h.b16 %v315
        %v366 = vunpack.c.l.b16 %v316
        %v367 = vunpack.c.h.b16 %v316
        %v368 = vpack.c.b16 %v356, %v352
        %v369 = vpack.c.b16 %v357, %v353
        %v370 = vpack.c.b16 %v358, %v354
        %v371 = vpack.c.b16 %v359, %v355
        %v372 = vpack.c.b16 %v364, %v360
        %v373 = vpack.c.b16 %v365, %v361
        %v374 = vpack.c.b16 %v366, %v362
        %v375 = vpack.c.b16 %v367, %v363
        %vm384 = vcmask 261120
        %v386 = vsel %vm384, %v343, 0
        %388 = vmatprep.subr.bf16.mxu0 %v369
        %389 = vmatpush1.bf16.msra.mxu0 %v368
        %390 = vmatprep.subr.bf16.mxu0 %v373
        %391 = vmatpush1.bf16.msra.mxu0 %v372
        %392 = vmatprep.subr.bf16.mxu0 0
        %393 = vmatpush1.bf16.msra.mxu0 0
        %394 = vmatprep.subr.bf16.mxu0 0
        %395 = vmatpush1.bf16.msra.mxu0 0
        %396 = vmatprep.subr.bf16.mxu0 0
        %397 = vmatpush1.bf16.msra.mxu0 0
        %398 = vmatprep.subr.bf16.mxu0 0
        %399 = vmatpush1.bf16.msra.mxu0 0
        %400 = vmatprep.subr.bf16.mxu0 0
        %401 = vmatpush1.bf16.msra.mxu0 0
        %402 = vmatprep.subr.bf16.mxu0 0
        %403 = vmatpush1.bf16.msra.mxu0 0
        %404 = vmatprep.subr.bf16.mxu0 0
        %405 = vmatpush1.bf16.msra.mxu0 0
        %406 = vmatprep.subr.bf16.mxu0 0
        %407 = vmatpush1.bf16.msra.mxu0 0
        %408 = vmatprep.subr.bf16.mxu0 0
        %409 = vmatpush1.bf16.msra.mxu0 0
        %410 = vmatprep.subr.bf16.mxu0 0
        %411 = vmatpush1.bf16.msra.mxu0 0
        %412 = vmatprep.subr.bf16.mxu0 0
        %413 = vmatpush1.bf16.msra.mxu0 0
        %414 = vmatprep.subr.bf16.mxu0 0
        %415 = vmatpush1.bf16.msra.mxu0 0
        %416 = vmatprep.subr.bf16.mxu0 0
        %417 = vmatpush1.bf16.msra.mxu0 0
        %418 = vmatprep.subr.bf16.mxu0 0
        %419 = vmatpush1.bf16.msra.mxu0 0
        %420 = vmatprep.mubr.bf16.mxu0 0
        %421 = vmatmul.mubr.bf16.gmra.mrb[0].mxu0 %v386
        %v422 = vpop.f32.mrb[0].mxu0
        %v423 = vadd.f32 %v322, %v422
        %v424 = vpop.f32.mrb[0].mxu0
        %v425 = vadd.f32 %v326, %v424
        %v426 = vpop.f32.mrb[0].mxu0
        %v427 = vadd.f32 %v322, %v426
        %v428 = vpop.f32.mrb[0].mxu0
        %v429 = vadd.f32 %v326, %v428
        %430 = vdwg.mxu0
        %431 = vmatprep.subr.bf16.mxu0 %v371
        %432 = vmatpush1.bf16.msra.mxu0 %v370
        %433 = vmatprep.subr.bf16.mxu0 %v375
        %434 = vmatpush1.bf16.msra.mxu0 %v374
        %435 = vmatprep.subr.bf16.mxu0 0
        %436 = vmatpush1.bf16.msra.mxu0 0
        %437 = vmatprep.subr.bf16.mxu0 0
        %438 = vmatpush1.bf16.msra.mxu0 0
        %439 = vmatprep.subr.bf16.mxu0 0
        %440 = vmatpush1.bf16.msra.mxu0 0
        %441 = vmatprep.subr.bf16.mxu0 0
        %442 = vmatpush1.bf16.msra.mxu0 0
        %443 = vmatprep.subr.bf16.mxu0 0
        %444 = vmatpush1.bf16.msra.mxu0 0
        %445 = vmatprep.subr.bf16.mxu0 0
        %446 = vmatpush1.bf16.msra.mxu0 0
        %447 = vmatprep.subr.bf16.mxu0 0
        %448 = vmatpush1.bf16.msra.mxu0 0
        %449 = vmatprep.subr.bf16.mxu0 0
        %450 = vmatpush1.bf16.msra.mxu0 0
        %451 = vmatprep.subr.bf16.mxu0 0
        %452 = vmatpush1.bf16.msra.mxu0 0
        %453 = vmatprep.subr.bf16.mxu0 0
        %454 = vmatpush1.bf16.msra.mxu0 0
        %455 = vmatprep.subr.bf16.mxu0 0
        %456 = vmatpush1.bf16.msra.mxu0 0
        %457 = vmatprep.subr.bf16.mxu0 0
        %458 = vmatpush1.bf16.msra.mxu0 0
        %459 = vmatprep.subr.bf16.mxu0 0
        %460 = vmatpush1.bf16.msra.mxu0 0
        %461 = vmatprep.subr.bf16.mxu0 0
        %462 = vmatpush1.bf16.msra.mxu0 0
        %463 = vmatprep.mubr.bf16.mxu0 0
        %464 = vmatmul.mubr.bf16.gmra.mrb[0].mxu0 %v386
        %v465 = vpop.f32.mrb[0].mxu0
        %v466 = vadd.f32 %v330, %v465
        %v467 = vpop.f32.mrb[0].mxu0
        %v468 = vadd.f32 %v334, %v467
        %v469 = vpop.f32.mrb[0].mxu0
        %v470 = vadd.f32 %v330, %v469
        %v471 = vpop.f32.mrb[0].mxu0
        %v472 = vadd.f32 %v334, %v471
        %473 = vdwg.mxu0
        %v474 = vld [vmem:[#allocation2] sm:$0xff]
        %v475 = vld [vmem:[#allocation2 + $0x8] sm:$0xff]
        %v476 = vmax.f32 %v423, %v466
        %v477 = vmax.f32 %v425, %v468
        %v478 = vmax.f32 %v476, %v477
        %479 = vmax.xlane.f32.xlu0 %v478
        %v480 = vpop.xlane.xlu0 %479
        %v481 = vmax.f32 %v427, %v470
        %v482 = vmax.f32 %v429, %v472
        %v483 = vmax.f32 %v481, %v482
        %484 = vmax.xlane.f32.xlu0 %v483
        %v485 = vpop.xlane.xlu0 %484
        %v486 = vmax.f32 %v474, %v480
        %v487 = vmax.f32 %v475, %v485
        %v488 = vsub.f32 %v474, %v486
        %v489 = vsub.f32 %v475, %v487
        %v490 = vmul.f32 %v488, 1.442695
        %v491 = vpow.pop %v490
        %v492 = vmul.f32 %v489, 1.442695
        %v493 = vpow.pop %v492
        %v494 = vld [vmem:[#allocation3] sm:$0xff]
        %v495 = vld [vmem:[#allocation3 + $0x8] sm:$0xff]
        %v496 = vmul.f32 %v491, %v494
        %v497 = vmul.f32 %v493, %v495
        %499 = vset.pattern.permute.xlu0 0
        %500 = vperm.xlu0 %499, %v486
        %v501 = vpop.permute.xlu0 %500
        %504 = vset.pattern.permute.xlu0 0
        %505 = vperm.xlu0 %504, %v487
        %v506 = vpop.permute.xlu0 %505
        %v508 = vsub.f32 %v423, %v501
        %v509 = vsub.f32 %v425, %v501
        %v510 = vsub.f32 %v466, %v501
        %v511 = vsub.f32 %v468, %v501
        %v512 = vsub.f32 %v427, %v506
        %v513 = vsub.f32 %v429, %v506
        %v514 = vsub.f32 %v470, %v506
        %v515 = vsub.f32 %v472, %v506
        %v516 = vmul.f32 %v508, 1.442695
        %v517 = vpow.pop %v516
        %v518 = vmul.f32 %v509, 1.442695
        %v519 = vpow.pop %v518
        %v520 = vmul.f32 %v510, 1.442695
        %v521 = vpow.pop %v520
        %v522 = vmul.f32 %v511, 1.442695
        %v523 = vpow.pop %v522
        %v524 = vmul.f32 %v512, 1.442695
        %v525 = vpow.pop %v524
        %v526 = vmul.f32 %v513, 1.442695
        %v527 = vpow.pop %v526
        %v528 = vmul.f32 %v514, 1.442695
        %v529 = vpow.pop %v528
        %v530 = vmul.f32 %v515, 1.442695
        %v531 = vpow.pop %v530
        %v532 = vadd.f32 %v517, %v519
        %v533 = vadd.f32 %v532, %v521
        %v534 = vadd.f32 %v533, %v523
        %535 = vadd.xlane.f32.xlu0 %v534
        %v536 = vpop.xlane.xlu0 %535
        %v537 = vadd.f32 %v525, %v527
        %v538 = vadd.f32 %v537, %v529
        %v539 = vadd.f32 %v538, %v531
        %540 = vadd.xlane.f32.xlu0 %v539
        %v541 = vpop.xlane.xlu0 %540
        %v542 = vadd.f32 %v496, %v536
        %v543 = vadd.f32 %v497, %v541
        %vm544 = vcmask 7168
        %545 = vst.msk [vmem:[#allocation3] sm:$0xff] %vm544, %v542
        %546 = vst.msk [vmem:[#allocation3 + $0x8] sm:$0xff] %vm544, %v543
        %547 = vst.msk [vmem:[#allocation2] sm:$0xff] %vm544, %v486
        %548 = vst.msk [vmem:[#allocation2 + $0x8] sm:$0xff] %vm544, %v487
        %549 = vst [vmem:[%s289] sm:$0xff] %v423
        %550 = vst [vmem:[%s289 + $0x8] sm:$0xff] %v425
        %551 = vst [vmem:[%s289 + $0x10] sm:$0xff] %v466
        %552 = vst [vmem:[%s289 + $0x18] sm:$0xff] %v468
        %553 = vst [vmem:[%s289 + $0x20] sm:$0xff] %v427
        %554 = vst [vmem:[%s289 + $0x28] sm:$0xff] %v429
        %555 = vst [vmem:[%s289 + $0x30] sm:$0xff] %v470
        %556 = vst [vmem:[%s289 + $0x38] sm:$0xff] %v472
        %p557 = scmp.eq.s32.totalorder %s29, 1
        // Predicated region
        $region49: #{generator_forward.2} parent=31 // pred_check
          %p558 = pneg %p557
        $region50: #{generator_forward.2} parent=31 // pred_check_branch
          %560 = sbr.rel (%p558) target = $region52
        $region51: #{generator_forward.2} parent=31 // pred_region
          %v561 = vld [vmem:[#allocation2] sm:$0xff]
          %v562 = vld [vmem:[#allocation2 + $0x8] sm:$0xff]
          %v563 = vld [vmem:[#allocation3] sm:$0xff]
          %v564 = vld [vmem:[#allocation3 + $0x8] sm:$0xff]
          %v565 = vlog2.pop %v563
          %v566 = vmul.f32 %v565, 0.6931472
          %v567 = vlog2.pop %v564
          %v568 = vmul.f32 %v567, 0.6931472
          %v569 = vadd.f32 %v561, %v566
          %v570 = vadd.f32 %v562, %v568
          %571 = vst.msk [vmem:[#allocation11] sm:$0xff] %vm544, %v569
          %572 = vst.msk [vmem:[#allocation11 + $0x8] sm:$0xff] %vm544, %v570
        $region52: #{generator_forward.2} parent=31 // pred_fallthru
          _
        %s573 = sand.u32 %s124, 1
        %s574 = scalar_lea.sflag [#allocation6], %s573
        %s575 = sand.u32 %s124, 1
        %s576 = smul.addr %s575, 64
        %s577 = scalar_lea.vmem [#allocation10], %s576
        // Predicated region
        $region53: #{generator_forward.2} parent=31 // pred_check
          %p578 = pneg %p134
        $region54: #{generator_forward.2} parent=31 // pred_check_branch
          %580 = sbr.rel (%p578) target = $region56
        $region55: #{generator_forward.2} parent=31 // pred_region
          %s581 = smul.u32 2, %s28
          %s582 = smul.u32 4, %s29
          %s584 = ssub.s32 1024, 1024
          %585 = vsyncadd %s574, %s584
          %s586 = smul.addr %s581, 8
          %s587 = sadd.s32 %s582, %s586
          %s588 = smul.addr %s587, 128
          %s589 = scalar_lea.hbm %s3, %s588
          %s590 = sshll.u32 %s577, 4
          %s591 = int_to_ptr.vmem [resolvable:$true] %s590
          %596 = dma.vmem_to_hbm [thread:$0]  %s591, 1024, %s589, %s574, 512, 1024, 32
        $region56: #{generator_forward.2} parent=31 // pred_fallthru
          _
        // Predicated region
        $region57: #{generator_forward.2} parent=31 // pred_check
          %p597 = pneg %p160
        $region58: #{generator_forward.2} parent=31 // pred_check_branch
          %599 = sbr.rel (%p597) target = $region60
        $region59: #{generator_forward.2} parent=31 // pred_region
          %s600 = smul.u32 2, %s28
          %s602 = ssub.s32 256, 256
          %603 = vsyncadd [#allocation12], %s602
          %s604 = smul.addr %s600, 128
          %s605 = scalar_lea.hbm %s4, %s604
          %s606 = sshll.u32 [#allocation11], 4
          %s607 = int_to_ptr.vmem [resolvable:$true] %s606
          %612 = dma.vmem_to_hbm [thread:$0]  %s607, 256, %s605, [#allocation12], 128, 128, 8
        $region60: #{generator_forward.2} parent=31 // pred_fallthru
          _
        // Predicated region
        $region61: #{generator_forward.2} parent=31 // pred_check
          %p613 = pneg %p160
        $region62: #{generator_forward.2} parent=31 // pred_check_branch
          %615 = sbr.rel (%p613) target = $region64
        $region63: #{generator_forward.2} parent=31 // pred_region
          %616 = dma.done [#allocation12], 256
        $region64: #{generator_forward.2} parent=31 // pred_fallthru
          _
      $region32: #{generator_forward.2} parent=5 // pred_fallthru
        _
      %p617 = scmp.le.s32.totalorder 2, %s19
      // Predicated region
      $region65: #{generator_forward.2} parent=5 // pred_check
        %p618 = pneg %p617
      $region66: #{generator_forward.2} parent=5 // pred_check_branch
        %620 = sbr.rel (%p618) target = $region68
      $region67: #{generator_forward.2} parent=5 // pred_region
        %s621 = ssub.s32 %s19, 2
        // Predicated region
        $region69: #{generator_forward.2} parent=67 // pred_check
          %p622 = pneg %p140
        $region70: #{generator_forward.2} parent=67 // pred_check_branch
          %624 = sbr.rel (%p622) target = $region72
        $region71: #{generator_forward.2} parent=67 // pred_region
          %s625 = sand.u32 %s125, 1
          %s626 = scalar_lea.sflag [#allocation6], %s625
          %s627 = sand.u32 %s125, 1
          %s628 = smul.addr %s627, 64
          %s629 = scalar_lea.vmem [#allocation10], %s628
          %630 = dma.done %s626, 1024
        $region72: #{generator_forward.2} parent=67 // pred_fallthru
          _
      $region68: #{generator_forward.2} parent=5 // pred_fallthru
        _
    $region6: #{generator_forward.2} parent=1 // loop_footer
      %s23 = sadd.s32 1, %s19
    $region7: #{generator_forward.2} parent=1 // loop_footer_branch
      %18 = sbr.rel target = $region3
    $region8: #{generator_forward.2} parent=1 // loop_exit
      _
    %631 = vsyncpa [#allocation5], 1
    %s632 = scalar_lea.sflag [#allocation5], 1
    %633 = vsyncpa %s632, 1
    %634 = vsyncpa [#allocation8], 1
    %s635 = scalar_lea.sflag [#allocation8], 1
    %636 = vsyncpa %s635, 1
    %637 = vsyncpa [#allocation6], 1
    %s638 = scalar_lea.sflag [#allocation6], 1
    %639 = vsyncpa %s638, 1
    %640 = vsyncpa [#allocation12], 1

</llo_original>
